<compile_context>
chip_gen: v7x
topology: tpu7x:2x2x1
jax: 0.10.0
libtpu: 0.0.40
codegen_flags: <defaults>
</compile_context>

<pallas_src>
import jax
import jax.numpy as jnp
from jax.experimental import pallas as pl
from jax.experimental.pallas import tpu as pltpu

IN_DIM = 3 * 32 * 32      # 3072
OUT = 10                  # logical number of classes
OUT_PAD = 128             # lane-dense padded output width
TK = 1024                 # K-split chunk (3072 / 1024 = 3 grid steps)
NEG_INF = -1e30           # finite mask value for padded logit columns


def linear_logsoftmax_kernel(x_ref, w_ref, b_ref, o_ref, acc_ref):
    k = pl.program_id(0)

    # Zero the f32 accumulator on the first K-chunk.
    @pl.when(k == 0)
    def _():
        acc_ref[...] = jnp.zeros_like(acc_ref)

    # bf16 x bf16 -> f32 accumulate on the MXU.
    acc_ref[...] += jnp.dot(x_ref[...], w_ref[...],
                            preferred_element_type=jnp.float32)

    # On the last K-chunk: add bias, mask padded columns, log_softmax, store.
    @pl.when(k == pl.num_programs(0) - 1)
    def _():
        logits = acc_ref[...] + b_ref[...]
        col = jax.lax.broadcasted_iota(jnp.int32, logits.shape, 1)
        logits = jnp.where(col < OUT, logits, NEG_INF)
        m = jnp.max(logits, axis=-1, keepdims=True)
        s = logits - m
        lse = jnp.log(jnp.sum(jnp.exp(s), axis=-1, keepdims=True))
        o_ref[...] = (s - lse).astype(o_ref.dtype)


def linear_net_forward(x_nchw, params):
    """x_nchw: (B, 3, 32, 32) float; params: (w, b) with w (3072, 10), b (10,)."""
    w, b = params
    B = x_nchw.shape[0]

    # Flatten exactly like torch's x.view(B, -1), then cast to bf16.
    x_flat = x_nchw.reshape(B, -1).astype(jnp.bfloat16)

    # Sublane-pad the batch to a multiple of 8 (zeros; sliced off afterwards).
    B_pad = max(8, -(-B // 8) * 8)
    if B_pad != B:
        x_flat = jnp.pad(x_flat, ((0, B_pad - B), (0, 0)))

    # Lane-pad the output dimension 10 -> 128 (zero weight columns; masked in-kernel).
    w_p = jnp.zeros((IN_DIM, OUT_PAD), jnp.bfloat16).at[:, :OUT].set(
        w.astype(jnp.bfloat16))
    b_p = jnp.zeros((1, OUT_PAD), jnp.float32).at[0, :OUT].set(
        b.astype(jnp.float32))

    n_k = IN_DIM // TK

    cost = pl.CostEstimate(
        flops=2 * B_pad * IN_DIM * OUT_PAD,
        transcendentals=B_pad * OUT_PAD,
        bytes_accessed=(B_pad * IN_DIM + IN_DIM * OUT_PAD) * 2
                       + OUT_PAD * 4 + B_pad * OUT_PAD * 4,
    )

    out = pl.pallas_call(
        linear_logsoftmax_kernel,
        out_shape=jax.ShapeDtypeStruct((B_pad, OUT_PAD), jnp.float32),
        grid_spec=pltpu.PrefetchScalarGridSpec(
            num_scalar_prefetch=0,
            grid=(n_k,),
            in_specs=[
                pl.BlockSpec((B_pad, TK), lambda k: (0, k)),        # x chunk
                pl.BlockSpec((TK, OUT_PAD), lambda k: (k, 0)),      # W chunk
                pl.BlockSpec((1, OUT_PAD), lambda k: (0, 0)),       # bias (resident)
            ],
            out_specs=pl.BlockSpec((B_pad, OUT_PAD), lambda k: (0, 0)),
            scratch_shapes=[pltpu.VMEM((B_pad, OUT_PAD), jnp.float32)],
        ),
        compiler_params=pltpu.CompilerParams(
            dimension_semantics=("arbitrary",),
            vmem_limit_bytes=32 * 1024 * 1024,
        ),
        cost_estimate=cost,
    )(x_flat, w_p, b_p)

    # Slice back to the logical (B, 10).
    return out[:B, :OUT]


def init_params(key):
    # Matches nn.Linear(3072, 10) default init; stored as (in, out) so the
    # kernel computes x @ W + b.
    kw, kb = jax.random.split(key)
    bound = 1.0 / jnp.sqrt(IN_DIM)
    w = jax.random.uniform(kw, (IN_DIM, OUT), jnp.float32, -bound, bound)
    b = jax.random.uniform(kb, (OUT,), jnp.float32, -bound, bound)
    return w, b


if __name__ == "__main__":
    key = jax.random.PRNGKey(0)
    k_params, k_x = jax.random.split(key)
    params = init_params(k_params)

    B = 2
    x = jax.random.normal(k_x, (B, 3, 32, 32), dtype=jnp.float32)

    out = linear_net_forward(x, params)
    out = jax.block_until_ready(out)

    assert out.shape == (B, OUT)
    # log_softmax rows should exponentiate-and-sum to 1
    row_sums = jnp.exp(out).sum(axis=1)
    assert bool(jnp.all(jnp.abs(row_sums - 1.0) < 1e-3)), row_sums

    print("KERNEL_OK")
</pallas_src>

<mosaic_0001>
module attributes {stable_mosaic.version = 11 : i64} {
  func.func @linear_logsoftmax_kernel(%arg0: i32, %arg1: memref<8x1024xbf16, #tpu.memory_space<vmem>>, %arg2: memref<1024x128xbf16, #tpu.memory_space<vmem>>, %arg3: memref<1x128xf32, #tpu.memory_space<vmem>>, %arg4: memref<8x128xf32, #tpu.memory_space<vmem>>, %arg5: memref<8x128xf32, #tpu.memory_space<vmem>>) attributes {dimension_semantics = [#tpu.dimension_semantics<arbitrary>], iteration_bounds = array<i64: 3>, scalar_prefetch = 0 : i64, scratch_operands = 1 : i64, tpu.core_type = #tpu.core_type<tc>, window_params = [{transform_indices = @transform_0, window_bounds = array<i64: 8, 1024>}, {transform_indices = @transform_1, window_bounds = array<i64: 1024, 128>}, {pipeline_mode = #tpu.pipeline_mode<synchronous>, transform_indices = @transform_2, window_bounds = array<i64: 1, 128>}, {pipeline_mode = #tpu.pipeline_mode<synchronous>, transform_indices = @transform_3, window_bounds = array<i64: 8, 128>}]} {
    %c0_i32 = arith.constant 0 : i32
    %0 = arith.cmpi eq, %arg0, %c0_i32 : i32
    %1 = arith.extui %0 : i1 to i32
    %c0_i32_0 = arith.constant 0 : i32
    %2 = arith.cmpi ne, %1, %c0_i32_0 : i32
    scf.if %2 {
      %cst_9 = arith.constant 0.000000e+00 : f32
      %12 = vector.broadcast %cst_9 : f32 to vector<8x128xf32>
      %c0_10 = arith.constant 0 : index
      %c0_11 = arith.constant 0 : index
      %13 = vector.load %arg5[%c0_10, %c0_11] : memref<8x128xf32, #tpu.memory_space<vmem>>, vector<8x128xf32>
      tpu.vector_store %arg5[%c0_10, %c0_11], %12 {strides = array<i32>} : memref<8x128xf32, #tpu.memory_space<vmem>>, vector<8x128xf32>,
    } else {
    }
    %c0 = arith.constant 0 : index
    %c0_1 = arith.constant 0 : index
    %3 = vector.load %arg5[%c0, %c0_1] : memref<8x128xf32, #tpu.memory_space<vmem>>, vector<8x128xf32>
    %c0_2 = arith.constant 0 : index
    %c0_3 = arith.constant 0 : index
    %4 = vector.load %arg1[%c0_2, %c0_3] : memref<8x1024xbf16, #tpu.memory_space<vmem>>, vector<8x1024xbf16>
    %c0_4 = arith.constant 0 : index
    %c0_5 = arith.constant 0 : index
    %5 = vector.load %arg2[%c0_4, %c0_5] : memref<1024x128xbf16, #tpu.memory_space<vmem>>, vector<1024x128xbf16>
    %cst = arith.constant dense<0.000000e+00> : vector<8x128xf32>
    %6 = tpu.matmul %4, %5, %cst {dimension_numbers = #tpu.dot_dimension_numbers<[1], [0], [0], [1], [0, 0, 1, 1], [], []>} : vector<8x1024xbf16>, vector<1024x128xbf16>, vector<8x128xf32> -> vector<8x128xf32>
    %7 = arith.addf %3, %6 : vector<8x128xf32>
    %c0_6 = arith.constant 0 : index
    %c0_7 = arith.constant 0 : index
    %8 = vector.load %arg5[%c0_6, %c0_7] : memref<8x128xf32, #tpu.memory_space<vmem>>, vector<8x128xf32>
    tpu.vector_store %arg5[%c0_6, %c0_7], %7 {strides = array<i32>} : memref<8x128xf32, #tpu.memory_space<vmem>>, vector<8x128xf32>,
    %c2_i32 = arith.constant 2 : i32
    %9 = arith.cmpi eq, %arg0, %c2_i32 : i32
    %10 = arith.extui %9 : i1 to i32
    %c0_i32_8 = arith.constant 0 : i32
    %11 = arith.cmpi ne, %10, %c0_i32_8 : i32
    scf.if %11 {
      %c0_9 = arith.constant 0 : index
      %c0_10 = arith.constant 0 : index
      %12 = vector.load %arg5[%c0_9, %c0_10] : memref<8x128xf32, #tpu.memory_space<vmem>>, vector<8x128xf32>
      %c0_11 = arith.constant 0 : index
      %c0_12 = arith.constant 0 : index
      %13 = vector.load %arg3[%c0_11, %c0_12] : memref<1x128xf32, #tpu.memory_space<vmem>>, vector<1x128xf32>
      %14 = vector.broadcast %13 : vector<1x128xf32> to vector<8x128xf32>
      %15 = arith.addf %12, %14 : vector<8x128xf32>
      %16 = tpu.iota {dimensions = array<i32: 1>} : vector<8x128xi32>
      %c10_i32 = arith.constant 10 : i32
      %17 = vector.broadcast %c10_i32 : i32 to vector<8x128xi32>
      %18 = arith.cmpi slt, %16, %17 : vector<8x128xi32>
      %cst_13 = arith.constant -1.000000e+30 : f32
      %19 = vector.broadcast %cst_13 : f32 to vector<8x128xf32>
      %20 = arith.select %18, %15, %19 : vector<8x128xi1>, vector<8x128xf32>
      %cst_14 = arith.constant dense<0xFF800000> : vector<8xf32>
      %21 = vector.multi_reduction <maximumf>, %20, %cst_14 [1] : vector<8x128xf32> to vector<8xf32>
      %22 = vector.shape_cast %21 : vector<8xf32> to vector<8x1xf32>
      %23 = vector.broadcast %22 : vector<8x1xf32> to vector<8x128xf32>
      %24 = arith.subf %20, %23 : vector<8x128xf32>
      %25 = math.exp %24 : vector<8x128xf32>
      %cst_15 = arith.constant dense<0.000000e+00> : vector<8xf32>
      %26 = vector.multi_reduction <add>, %25, %cst_15 [1] : vector<8x128xf32> to vector<8xf32>
      %27 = vector.shape_cast %26 : vector<8xf32> to vector<8x1xf32>
      %28 = math.log %27 : vector<8x1xf32>
      %29 = vector.broadcast %28 : vector<8x1xf32> to vector<8x128xf32>
      %30 = arith.subf %24, %29 : vector<8x128xf32>
      %c0_16 = arith.constant 0 : index
      %c0_17 = arith.constant 0 : index
      %31 = vector.load %arg4[%c0_16, %c0_17] : memref<8x128xf32, #tpu.memory_space<vmem>>, vector<8x128xf32>
      tpu.vector_store %arg4[%c0_16, %c0_17], %30 {strides = array<i32>} : memref<8x128xf32, #tpu.memory_space<vmem>>, vector<8x128xf32>,
    } else {
    }
    return
  }
  func.func @transform_0(%arg0: i32) -> (i32, i32) {
    %c0_i32 = arith.constant 0 : i32
    %c0_i32_0 = arith.constant 0 : i32
    return %c0_i32, %arg0 : i32, i32
  }
  func.func @transform_1(%arg0: i32) -> (i32, i32) {
    %c0_i32 = arith.constant 0 : i32
    %c0_i32_0 = arith.constant 0 : i32
    return %arg0, %c0_i32 : i32, i32
  }
  func.func @transform_2(%arg0: i32) -> (i32, i32) {
    %c0_i32 = arith.constant 0 : i32
    %c0_i32_0 = arith.constant 0 : i32
    %c0_i32_1 = arith.constant 0 : i32
    return %c0_i32, %c0_i32_0 : i32, i32
  }
  func.func @transform_3(%arg0: i32) -> (i32, i32) {
    %c0_i32 = arith.constant 0 : i32
    %c0_i32_0 = arith.constant 0 : i32
    %c0_i32_1 = arith.constant 0 : i32
    return %c0_i32, %c0_i32_0 : i32, i32
  }
}

</mosaic_0001>

<llo_original>
// kernel: tpu_custom_call.1
$region0: #{tpu_custom_call.1}
  #allocation0 [shape = 'u32[]', space=smem, size = 0x4, offset = 0x4, fixed_abs, tag = 'smem constant byte address 0x4 - core index']
  #allocation1 [shape = 'u32[144,128]{1,0:T(1,128)}', space=vmem, size = 0x12000, scoped, tag = 'internal scratch']
  #allocation2 [shape = 'f32[8,128]{1,0:T(8,128)}', space=vmem, size = 0x1000, scoped, tag = 'scratch operand']
  %s0 = inlined_call_operand.hbm [shape: bf16[8,3072], index: 0, kind: input, shape index: {}]
  %s1 = inlined_call_operand.hbm [shape: bf16[3072,128], index: 1, kind: input, shape index: {}]
  %s2 = inlined_call_operand.vmem [shape: f32[1,128], index: 2, kind: input, shape index: {}]
  %s3 = inlined_call_operand.hbm [shape: f32[8,128], index: 3, kind: output, shape index: {}]
  %s4 = sld [smem:[#allocation0]]
  $region61: #{tpu_custom_call.1} parent=0
    _
  %s6 = ssub.s32 1, %s4
  %s7 = scalar_select 0, %s6, %s4
  $region1: #{tpu_custom_call.1} parent=0
    #allocation3 [shape = 'u8[32768]{0}', space=vmem, size = 0x8000, scoped, tag = 'input window, operand 0']
    #allocation4 [shape = 's32[2]{0}', space=sflag, size = 0x8, scoped, tag = 'scoped memory for tpu_custom_call.1']
    #allocation5 [shape = 's32[2]{0}', space=sflag, size = 0x8, scoped, tag = 'scoped memory for tpu_custom_call.1']
    #allocation6 [shape = 'u8[524288]{0}', space=vmem, size = 0x80000, scoped, tag = 'input window, operand 1']
    #allocation7 [shape = 's32[2]{0}', space=sflag, size = 0x8, scoped, tag = 'scoped memory for tpu_custom_call.1']
    #allocation8 [shape = 'u8[4096]{0}', space=vmem, size = 0x1000, scoped, tag = 'output window, operand 0, single buffered']
    %8 = vsyncpa [#allocation4], 0
    %s9 = scalar_lea.sflag [#allocation4], 1
    %10 = vsyncpa %s9, 0
    %11 = vsyncpa [#allocation7], 0
    %s12 = scalar_lea.sflag [#allocation7], 1
    %13 = vsyncpa %s12, 0
    %14 = vsyncpa [#allocation5], 0
    loop: start=0, step=1, limit=5
    $region2: #{tpu_custom_call.1} parent=1 // loop_pre_header
      _
    $region3: #{tpu_custom_call.1} parent=1 // loop_header
      %s16 = sphi 0, %s20
      %p17 = scmp.ge.s32.totalorder %s16, 5
      %s26 = sphi 0, %s28
      %s29 = sphi 0, %s26
      %s30 = sphi 0, %s29
      %s46 = sphi 0, %s30
      %s52 = sphi 0, %s54
      %s55 = sphi 0, %s52
      %s56 = sphi 0, %s55
      %s72 = sphi 0, %s56
      %s76 = sphi 0, %s76
      %s78 = sphi 0, %s76
      %s79 = sphi 0, %s78
      %s93 = sphi 0, %s79
      %s97 = sphi 0, %s97
      %s99 = sphi 0, %s97
      %s100 = sphi 0, %s99
      %s114 = sphi 0, %s100
    $region4: #{tpu_custom_call.1} parent=1 // loop_header_branch
      %19 = sbr.rel (%p17) target = $region8
    $region5: #{tpu_custom_call.1} parent=1 // loop_body
      %s21 = ssub.s32 %s16, 1
      %s22 = ssub.s32 %s16, 2
      %s23 = sadd.s32 %s16, 1
      %s24 = ssub.s32 %s16, %s23
      %p25 = scmp.eq.s32.totalorder %s24, 0
      %s27 = sadd.s32 %s26, 1
      %s28 = scalar_select %p25, %s26, %s27
      %p31 = pneg %p25
      %p32 = scmp.eq.s32.totalorder %s16, 2
      %p33 = por %p31, %p32
      %p34 = scmp.ne.s32.totalorder %s26, %s29
      %p35 = scmp.eq.s32.totalorder %s16, 0
      %p36 = por %p34, %p35
      %p37 = scmp.ne.s32.totalorder %s26, %s29
      %p38 = scmp.eq.s32.totalorder %s21, 2
      %p39 = por %p37, %p38
      %p40 = scmp.ne.s32.totalorder %s29, %s30
      %p41 = scmp.eq.s32.totalorder %s21, 0
      %p42 = por %p40, %p41
      %p43 = scmp.ne.s32.totalorder %s29, %s30
      %p44 = scmp.eq.s32.totalorder %s22, 2
      %p45 = por %p43, %p44
      %p47 = scmp.ne.s32.totalorder %s30, %s46
      %p48 = scmp.eq.s32.totalorder %s22, 0
      %p49 = por %p47, %p48
      %s50 = ssub.s32 %s16, %s23
      %p51 = scmp.eq.s32.totalorder %s50, 0
      %s53 = sadd.s32 %s52, 1
      %s54 = scalar_select %p51, %s52, %s53
      %p57 = pneg %p51
      %p58 = scmp.eq.s32.totalorder %s16, 2
      %p59 = por %p57, %p58
      %p60 = scmp.ne.s32.totalorder %s52, %s55
      %p61 = scmp.eq.s32.totalorder %s16, 0
      %p62 = por %p60, %p61
      %p63 = scmp.ne.s32.totalorder %s52, %s55
      %p64 = scmp.eq.s32.totalorder %s21, 2
      %p65 = por %p63, %p64
      %p66 = scmp.ne.s32.totalorder %s55, %s56
      %p67 = scmp.eq.s32.totalorder %s21, 0
      %p68 = por %p66, %p67
      %p69 = scmp.ne.s32.totalorder %s55, %s56
      %p70 = scmp.eq.s32.totalorder %s22, 2
      %p71 = por %p69, %p70
      %p73 = scmp.ne.s32.totalorder %s56, %s72
      %p74 = scmp.eq.s32.totalorder %s22, 0
      %p75 = por %p73, %p74
      %s77 = sadd.s32 %s76, 1
      %p80 = scmp.eq.s32.totalorder %s16, 2
      %p81 = scmp.ne.s32.totalorder %s76, %s78
      %p82 = scmp.eq.s32.totalorder %s16, 0
      %p83 = por %p81, %p82
      %p84 = scmp.ne.s32.totalorder %s76, %s78
      %p85 = scmp.eq.s32.totalorder %s21, 2
      %p86 = por %p84, %p85
      %p87 = scmp.ne.s32.totalorder %s78, %s79
      %p88 = scmp.eq.s32.totalorder %s21, 0
      %p89 = por %p87, %p88
      %p90 = scmp.ne.s32.totalorder %s78, %s79
      %p91 = scmp.eq.s32.totalorder %s22, 2
      %p92 = por %p90, %p91
      %p94 = scmp.ne.s32.totalorder %s79, %s93
      %p95 = scmp.eq.s32.totalorder %s22, 0
      %p96 = por %p94, %p95
      %s98 = sadd.s32 %s97, 1
      %p101 = scmp.eq.s32.totalorder %s16, 2
      %p102 = scmp.ne.s32.totalorder %s97, %s99
      %p103 = scmp.eq.s32.totalorder %s16, 0
      %p104 = por %p102, %p103
      %p105 = scmp.ne.s32.totalorder %s97, %s99
      %p106 = scmp.eq.s32.totalorder %s21, 2
      %p107 = por %p105, %p106
      %p108 = scmp.ne.s32.totalorder %s99, %s100
      %p109 = scmp.eq.s32.totalorder %s21, 0
      %p110 = por %p108, %p109
      %p111 = scmp.ne.s32.totalorder %s99, %s100
      %p112 = scmp.eq.s32.totalorder %s22, 2
      %p113 = por %p111, %p112
      %p115 = scmp.ne.s32.totalorder %s100, %s114
      %p116 = scmp.eq.s32.totalorder %s22, 0
      %p117 = por %p115, %p116
      %p118 = scmp.le.s32.totalorder 1, %s16
      %p119 = scmp.lt.s32.totalorder %s16, 4
      %p120 = pnand %p118, %p119
      %p121 = pneg %p120
      // Predicated region
      $region9: #{tpu_custom_call.1} parent=5 // pred_check
        _
      $region10: #{tpu_custom_call.1} parent=5 // pred_check_branch
        %123 = sbr.rel (%p120) target = $region12
      $region11: #{tpu_custom_call.1} parent=5 // pred_region
        %s124 = ssub.s32 %s16, 1
        // Predicated region
        $region13: #{tpu_custom_call.1} parent=11 // pred_check
          %p125 = pneg %p89
        $region14: #{tpu_custom_call.1} parent=11 // pred_check_branch
          %127 = sbr.rel (%p125) target = $region16
        $region15: #{tpu_custom_call.1} parent=11 // pred_region
          _
        $region16: #{tpu_custom_call.1} parent=11 // pred_fallthru
          _
      $region12: #{tpu_custom_call.1} parent=5 // pred_fallthru
        _
      %p128 = scmp.lt.s32.totalorder %s16, 3
      // Predicated region
      $region17: #{tpu_custom_call.1} parent=5 // pred_check
        %p129 = pneg %p128
      $region18: #{tpu_custom_call.1} parent=5 // pred_check_branch
        %131 = sbr.rel (%p129) target = $region20
      $region19: #{tpu_custom_call.1} parent=5 // pred_region
        // Predicated region
        $region21: #{tpu_custom_call.1} parent=19 // pred_check
          %p132 = pneg %p36
        $region22: #{tpu_custom_call.1} parent=19 // pred_check_branch
          %134 = sbr.rel (%p132) target = $region24
        $region23: #{tpu_custom_call.1} parent=19 // pred_region
          %s135 = sand.u32 %s26, 1
          %s136 = scalar_lea.sflag [#allocation4], %s135
          %s137 = sand.u32 %s26, 1
          %s138 = smul.addr %s137, 32
          %s139 = scalar_lea.vmem [#allocation3], %s138
          %s140 = smul.u32 8, %s16
          %s142 = ssub.s32 512, 512
          %143 = vsyncadd %s136, %s142
          %s144 = smul.addr %s140, 64
          %s145 = scalar_lea.hbm %s0, %s144
          %s147 = sshll.u32 %s139, 4
          %s148 = int_to_ptr.vmem [resolvable:$true] %s147
          %150 = dma.hbm_to_vmem [thread:$0]  %s145, 512, %s148, %s136
        $region24: #{tpu_custom_call.1} parent=19 // pred_fallthru
          _
        // Predicated region
        $region25: #{tpu_custom_call.1} parent=19 // pred_check
          %p151 = pneg %p62
        $region26: #{tpu_custom_call.1} parent=19 // pred_check_branch
          %153 = sbr.rel (%p151) target = $region28
        $region27: #{tpu_custom_call.1} parent=19 // pred_region
          %s154 = sand.u32 %s52, 1
          %s155 = scalar_lea.sflag [#allocation7], %s154
          %s156 = sand.u32 %s52, 1
          %s157 = smul.addr %s156, 512
          %s158 = scalar_lea.vmem [#allocation6], %s157
          %s159 = smul.u32 128, %s16
          %s161 = ssub.s32 8192, 8192
          %162 = vsyncadd %s155, %s161
          %s163 = smul.addr %s159, 64
          %s164 = scalar_lea.hbm %s1, %s163
          %s165 = sshll.u32 %s158, 4
          %s166 = int_to_ptr.vmem [resolvable:$true] %s165
          %171 = dma.hbm_to_vmem [thread:$0]  %s164, 8192, %s166, %s155, 64, 64, 4
        $region28: #{tpu_custom_call.1} parent=19 // pred_fallthru
          _
      $region20: #{tpu_custom_call.1} parent=5 // pred_fallthru
        _
      %p172 = scmp.le.s32.totalorder 1, %s16
      %p173 = scmp.lt.s32.totalorder %s16, 4
      %p174 = pnand %p172, %p173
      %p175 = pneg %p174
      // Predicated region
      $region29: #{tpu_custom_call.1} parent=5 // pred_check
        _
      $region30: #{tpu_custom_call.1} parent=5 // pred_check_branch
        %177 = sbr.rel (%p174) target = $region32
      $region31: #{tpu_custom_call.1} parent=5 // pred_region
        %s178 = ssub.s32 %s16, 1
        %s179 = sand.u32 %s29, 1
        %s180 = scalar_lea.sflag [#allocation4], %s179
        %s181 = sand.u32 %s29, 1
        %s182 = smul.addr %s181, 32
        %s183 = scalar_lea.vmem [#allocation3], %s182
        // Predicated region
        $region33: #{tpu_custom_call.1} parent=31 // pred_check
          %p184 = pneg %p42
        $region34: #{tpu_custom_call.1} parent=31 // pred_check_branch
          %186 = sbr.rel (%p184) target = $region36
        $region35: #{tpu_custom_call.1} parent=31 // pred_region
          %187 = dma.done %s180, 512
        $region36: #{tpu_custom_call.1} parent=31 // pred_fallthru
          _
        %s188 = sand.u32 %s55, 1
        %s189 = scalar_lea.sflag [#allocation7], %s188
        %s190 = sand.u32 %s55, 1
        %s191 = smul.addr %s190, 512
        %s192 = scalar_lea.vmem [#allocation6], %s191
        // Predicated region
        $region37: #{tpu_custom_call.1} parent=31 // pred_check
          %p193 = pneg %p68
        $region38: #{tpu_custom_call.1} parent=31 // pred_check_branch
          %195 = sbr.rel (%p193) target = $region40
        $region39: #{tpu_custom_call.1} parent=31 // pred_region
          %196 = dma.done %s189, 8192
        $region40: #{tpu_custom_call.1} parent=31 // pred_fallthru
          _
        %s197 = sand.u32 %s29, 1
        %s198 = scalar_lea.sflag [#allocation4], %s197
        %s199 = sand.u32 %s29, 1
        %s200 = smul.addr %s199, 32
        %s201 = scalar_lea.vmem [#allocation3], %s200
        %p202 = pneg %p42
        %p203 = pneg %p39
        %s204 = sand.u32 %s55, 1
        %s205 = scalar_lea.sflag [#allocation7], %s204
        %s206 = sand.u32 %s55, 1
        %s207 = smul.addr %s206, 512
        %s208 = scalar_lea.vmem [#allocation6], %s207
        %p209 = pneg %p68
        %p210 = pneg %p65
        %p211 = pneg %p89
        %p212 = pneg %p86
        %p213 = pneg %p110
        %p214 = pneg %p107
        %s215 = smul.u32 8, %s21
        %s216 = smul.u32 128, %s21
        %p218 = scmp.eq.s32.totalorder %s21, 0
        // Predicated region
        $region41: #{tpu_custom_call.1} parent=31 // pred_check
          %p219 = pneg %p218
        $region42: #{tpu_custom_call.1} parent=31 // pred_check_branch
          %221 = sbr.rel (%p219) target = $region44
        $region43: #{tpu_custom_call.1} parent=31 // pred_region
          %222 = vst [vmem:[#allocation2] sm:$0xff] 0.0
        $region44: #{tpu_custom_call.1} parent=31 // pred_fallthru
          _
        %v223 = vld [vmem:[#allocation2] sm:$0xff]
        %v224 = vld [vmem:[%s183] sm:$0xff]
        %v225 = vld [vmem:[%s183 + $0x8] sm:$0xff]
        %v226 = vld [vmem:[%s183 + $0x10] sm:$0xff]
        %v227 = vld [vmem:[%s183 + $0x18] sm:$0xff]
        %v228 = vld [vmem:[%s192] sm:$0xf]
        %v229 = vld [vmem:[%s192 + $0x4] sm:$0xf]
        %v230 = vld [vmem:[%s192 + $0x8] sm:$0xf]
        %v231 = vld [vmem:[%s192 + $0xc] sm:$0xf]
        %v232 = vld [vmem:[%s192 + $0x10] sm:$0xf]
        %v233 = vld [vmem:[%s192 + $0x14] sm:$0xf]
        %v234 = vld [vmem:[%s192 + $0x18] sm:$0xf]
        %v235 = vld [vmem:[%s192 + $0x1c] sm:$0xf]
        %v236 = vld [vmem:[%s192 + $0x20] sm:$0xf]
        %v237 = vld [vmem:[%s192 + $0x24] sm:$0xf]
        %v238 = vld [vmem:[%s192 + $0x28] sm:$0xf]
        %v239 = vld [vmem:[%s192 + $0x2c] sm:$0xf]
        %v240 = vld [vmem:[%s192 + $0x30] sm:$0xf]
        %v241 = vld [vmem:[%s192 + $0x34] sm:$0xf]
        %v242 = vld [vmem:[%s192 + $0x38] sm:$0xf]
        %v243 = vld [vmem:[%s192 + $0x3c] sm:$0xf]
        %v244 = vld [vmem:[%s192 + $0x40] sm:$0xf]
        %v245 = vld [vmem:[%s192 + $0x44] sm:$0xf]
        %v246 = vld [vmem:[%s192 + $0x48] sm:$0xf]
        %v247 = vld [vmem:[%s192 + $0x4c] sm:$0xf]
        %v248 = vld [vmem:[%s192 + $0x50] sm:$0xf]
        %v249 = vld [vmem:[%s192 + $0x54] sm:$0xf]
        %v250 = vld [vmem:[%s192 + $0x58] sm:$0xf]
        %v251 = vld [vmem:[%s192 + $0x5c] sm:$0xf]
        %v252 = vld [vmem:[%s192 + $0x60] sm:$0xf]
        %v253 = vld [vmem:[%s192 + $0x64] sm:$0xf]
        %v254 = vld [vmem:[%s192 + $0x68] sm:$0xf]
        %v255 = vld [vmem:[%s192 + $0x6c] sm:$0xf]
        %v256 = vld [vmem:[%s192 + $0x70] sm:$0xf]
        %v257 = vld [vmem:[%s192 + $0x74] sm:$0xf]
        %v258 = vld [vmem:[%s192 + $0x78] sm:$0xf]
        %v259 = vld [vmem:[%s192 + $0x7c] sm:$0xf]
        %v260 = vld [vmem:[%s192 + $0x80] sm:$0xf]
        %v261 = vld [vmem:[%s192 + $0x84] sm:$0xf]
        %v262 = vld [vmem:[%s192 + $0x88] sm:$0xf]
        %v263 = vld [vmem:[%s192 + $0x8c] sm:$0xf]
        %v264 = vld [vmem:[%s192 + $0x90] sm:$0xf]
        %v265 = vld [vmem:[%s192 + $0x94] sm:$0xf]
        %v266 = vld [vmem:[%s192 + $0x98] sm:$0xf]
        %v267 = vld [vmem:[%s192 + $0x9c] sm:$0xf]
        %v268 = vld [vmem:[%s192 + $0xa0] sm:$0xf]
        %v269 = vld [vmem:[%s192 + $0xa4] sm:$0xf]
        %v270 = vld [vmem:[%s192 + $0xa8] sm:$0xf]
        %v271 = vld [vmem:[%s192 + $0xac] sm:$0xf]
        %v272 = vld [vmem:[%s192 + $0xb0] sm:$0xf]
        %v273 = vld [vmem:[%s192 + $0xb4] sm:$0xf]
        %v274 = vld [vmem:[%s192 + $0xb8] sm:$0xf]
        %v275 = vld [vmem:[%s192 + $0xbc] sm:$0xf]
        %v276 = vld [vmem:[%s192 + $0xc0] sm:$0xf]
        %v277 = vld [vmem:[%s192 + $0xc4] sm:$0xf]
        %v278 = vld [vmem:[%s192 + $0xc8] sm:$0xf]
        %v279 = vld [vmem:[%s192 + $0xcc] sm:$0xf]
        %v280 = vld [vmem:[%s192 + $0xd0] sm:$0xf]
        %v281 = vld [vmem:[%s192 + $0xd4] sm:$0xf]
        %v282 = vld [vmem:[%s192 + $0xd8] sm:$0xf]
        %v283 = vld [vmem:[%s192 + $0xdc] sm:$0xf]
        %v284 = vld [vmem:[%s192 + $0xe0] sm:$0xf]
        %v285 = vld [vmem:[%s192 + $0xe4] sm:$0xf]
        %v286 = vld [vmem:[%s192 + $0xe8] sm:$0xf]
        %v287 = vld [vmem:[%s192 + $0xec] sm:$0xf]
        %v288 = vld [vmem:[%s192 + $0xf0] sm:$0xf]
        %v289 = vld [vmem:[%s192 + $0xf4] sm:$0xf]
        %v290 = vld [vmem:[%s192 + $0xf8] sm:$0xf]
        %v291 = vld [vmem:[%s192 + $0xfc] sm:$0xf]
        %v292 = vld [vmem:[%s192 + $0x100] sm:$0xf]
        %v293 = vld [vmem:[%s192 + $0x104] sm:$0xf]
        %v294 = vld [vmem:[%s192 + $0x108] sm:$0xf]
        %v295 = vld [vmem:[%s192 + $0x10c] sm:$0xf]
        %v296 = vld [vmem:[%s192 + $0x110] sm:$0xf]
        %v297 = vld [vmem:[%s192 + $0x114] sm:$0xf]
        %v298 = vld [vmem:[%s192 + $0x118] sm:$0xf]
        %v299 = vld [vmem:[%s192 + $0x11c] sm:$0xf]
        %v300 = vld [vmem:[%s192 + $0x120] sm:$0xf]
        %v301 = vld [vmem:[%s192 + $0x124] sm:$0xf]
        %v302 = vld [vmem:[%s192 + $0x128] sm:$0xf]
        %v303 = vld [vmem:[%s192 + $0x12c] sm:$0xf]
        %v304 = vld [vmem:[%s192 + $0x130] sm:$0xf]
        %v305 = vld [vmem:[%s192 + $0x134] sm:$0xf]
        %v306 = vld [vmem:[%s192 + $0x138] sm:$0xf]
        %v307 = vld [vmem:[%s192 + $0x13c] sm:$0xf]
        %v308 = vld [vmem:[%s192 + $0x140] sm:$0xf]
        %v309 = vld [vmem:[%s192 + $0x144] sm:$0xf]
        %v310 = vld [vmem:[%s192 + $0x148] sm:$0xf]
        %v311 = vld [vmem:[%s192 + $0x14c] sm:$0xf]
        %v312 = vld [vmem:[%s192 + $0x150] sm:$0xf]
        %v313 = vld [vmem:[%s192 + $0x154] sm:$0xf]
        %v314 = vld [vmem:[%s192 + $0x158] sm:$0xf]
        %v315 = vld [vmem:[%s192 + $0x15c] sm:$0xf]
        %v316 = vld [vmem:[%s192 + $0x160] sm:$0xf]
        %v317 = vld [vmem:[%s192 + $0x164] sm:$0xf]
        %v318 = vld [vmem:[%s192 + $0x168] sm:$0xf]
        %v319 = vld [vmem:[%s192 + $0x16c] sm:$0xf]
        %v320 = vld [vmem:[%s192 + $0x170] sm:$0xf]
        %v321 = vld [vmem:[%s192 + $0x174] sm:$0xf]
        %v322 = vld [vmem:[%s192 + $0x178] sm:$0xf]
        %v323 = vld [vmem:[%s192 + $0x17c] sm:$0xf]
        %v324 = vld [vmem:[%s192 + $0x180] sm:$0xf]
        %v325 = vld [vmem:[%s192 + $0x184] sm:$0xf]
        %v326 = vld [vmem:[%s192 + $0x188] sm:$0xf]
        %v327 = vld [vmem:[%s192 + $0x18c] sm:$0xf]
        %v328 = vld [vmem:[%s192 + $0x190] sm:$0xf]
        %v329 = vld [vmem:[%s192 + $0x194] sm:$0xf]
        %v330 = vld [vmem:[%s192 + $0x198] sm:$0xf]
        %v331 = vld [vmem:[%s192 + $0x19c] sm:$0xf]
        %v332 = vld [vmem:[%s192 + $0x1a0] sm:$0xf]
        %v333 = vld [vmem:[%s192 + $0x1a4] sm:$0xf]
        %v334 = vld [vmem:[%s192 + $0x1a8] sm:$0xf]
        %v335 = vld [vmem:[%s192 + $0x1ac] sm:$0xf]
        %v336 = vld [vmem:[%s192 + $0x1b0] sm:$0xf]
        %v337 = vld [vmem:[%s192 + $0x1b4] sm:$0xf]
        %v338 = vld [vmem:[%s192 + $0x1b8] sm:$0xf]
        %v339 = vld [vmem:[%s192 + $0x1bc] sm:$0xf]
        %v340 = vld [vmem:[%s192 + $0x1c0] sm:$0xf]
        %v341 = vld [vmem:[%s192 + $0x1c4] sm:$0xf]
        %v342 = vld [vmem:[%s192 + $0x1c8] sm:$0xf]
        %v343 = vld [vmem:[%s192 + $0x1cc] sm:$0xf]
        %v344 = vld [vmem:[%s192 + $0x1d0] sm:$0xf]
        %v345 = vld [vmem:[%s192 + $0x1d4] sm:$0xf]
        %v346 = vld [vmem:[%s192 + $0x1d8] sm:$0xf]
        %v347 = vld [vmem:[%s192 + $0x1dc] sm:$0xf]
        %v348 = vld [vmem:[%s192 + $0x1e0] sm:$0xf]
        %v349 = vld [vmem:[%s192 + $0x1e4] sm:$0xf]
        %v350 = vld [vmem:[%s192 + $0x1e8] sm:$0xf]
        %v351 = vld [vmem:[%s192 + $0x1ec] sm:$0xf]
        %v352 = vld [vmem:[%s192 + $0x1f0] sm:$0xf]
        %v353 = vld [vmem:[%s192 + $0x1f4] sm:$0xf]
        %v354 = vld [vmem:[%s192 + $0x1f8] sm:$0xf]
        %v355 = vld [vmem:[%s192 + $0x1fc] sm:$0xf]
        %v360 = vunpack.c.l.b16 %v224
        %v361 = vunpack.c.h.b16 %v224
        %v362 = vunpack.c.l.b16 %v225
        %v363 = vunpack.c.h.b16 %v225
        %v364 = vunpack.c.l.b16 %v226
        %v365 = vunpack.c.h.b16 %v226
        %v366 = vunpack.c.l.b16 %v227
        %v367 = vunpack.c.h.b16 %v227
        %v368 = vpack.c.b16 %v360, %v360
        %v369 = vpack.c.b16 %v361, %v361
        %v370 = vpack.c.b16 %v362, %v362
        %v371 = vpack.c.b16 %v363, %v363
        %v372 = vpack.c.b16 %v364, %v364
        %v373 = vpack.c.b16 %v365, %v365
        %v374 = vpack.c.b16 %v366, %v366
        %v375 = vpack.c.b16 %v367, %v367
        %v512 = vunpack.c.l.b16 %v228
        %v513 = vunpack.c.l.b16 %v229
        %v514 = vunpack.c.l.b16 %v230
        %v515 = vunpack.c.l.b16 %v231
        %v516 = vunpack.c.l.b16 %v232
        %v517 = vunpack.c.l.b16 %v233
        %v518 = vunpack.c.l.b16 %v234
        %v519 = vunpack.c.l.b16 %v235
        %v520 = vunpack.c.l.b16 %v236
        %v521 = vunpack.c.l.b16 %v237
        %v522 = vunpack.c.l.b16 %v238
        %v523 = vunpack.c.l.b16 %v239
        %v524 = vunpack.c.l.b16 %v240
        %v525 = vunpack.c.l.b16 %v241
        %v526 = vunpack.c.l.b16 %v242
        %v527 = vunpack.c.l.b16 %v243
        %v528 = vunpack.c.l.b16 %v244
        %v529 = vunpack.c.l.b16 %v245
        %v530 = vunpack.c.l.b16 %v246
        %v531 = vunpack.c.l.b16 %v247
        %v532 = vunpack.c.l.b16 %v248
        %v533 = vunpack.c.l.b16 %v249
        %v534 = vunpack.c.l.b16 %v250
        %v535 = vunpack.c.l.b16 %v251
        %v536 = vunpack.c.l.b16 %v252
        %v537 = vunpack.c.l.b16 %v253
        %v538 = vunpack.c.l.b16 %v254
        %v539 = vunpack.c.l.b16 %v255
        %v540 = vunpack.c.l.b16 %v256
        %v541 = vunpack.c.l.b16 %v257
        %v542 = vunpack.c.l.b16 %v258
        %v543 = vunpack.c.l.b16 %v259
        %v544 = vunpack.c.l.b16 %v260
        %v545 = vunpack.c.l.b16 %v261
        %v546 = vunpack.c.l.b16 %v262
        %v547 = vunpack.c.l.b16 %v263
        %v548 = vunpack.c.l.b16 %v264
        %v549 = vunpack.c.l.b16 %v265
        %v550 = vunpack.c.l.b16 %v266
        %v551 = vunpack.c.l.b16 %v267
        %v552 = vunpack.c.l.b16 %v268
        %v553 = vunpack.c.l.b16 %v269
        %v554 = vunpack.c.l.b16 %v270
        %v555 = vunpack.c.l.b16 %v271
        %v556 = vunpack.c.l.b16 %v272
        %v557 = vunpack.c.l.b16 %v273
        %v558 = vunpack.c.l.b16 %v274
        %v559 = vunpack.c.l.b16 %v275
        %v560 = vunpack.c.l.b16 %v276
        %v561 = vunpack.c.l.b16 %v277
        %v562 = vunpack.c.l.b16 %v278
        %v563 = vunpack.c.l.b16 %v279
        %v564 = vunpack.c.l.b16 %v280
        %v565 = vunpack.c.l.b16 %v281
        %v566 = vunpack.c.l.b16 %v282
        %v567 = vunpack.c.l.b16 %v283
        %v568 = vunpack.c.l.b16 %v284
        %v569 = vunpack.c.l.b16 %v285
        %v570 = vunpack.c.l.b16 %v286
        %v571 = vunpack.c.l.b16 %v287
        %v572 = vunpack.c.l.b16 %v288
        %v573 = vunpack.c.l.b16 %v289
        %v574 = vunpack.c.l.b16 %v290
        %v575 = vunpack.c.l.b16 %v291
        %v576 = vunpack.c.l.b16 %v292
        %v577 = vunpack.c.l.b16 %v293
        %v578 = vunpack.c.l.b16 %v294
        %v579 = vunpack.c.l.b16 %v295
        %v580 = vunpack.c.l.b16 %v296
        %v581 = vunpack.c.l.b16 %v297
        %v582 = vunpack.c.l.b16 %v298
        %v583 = vunpack.c.l.b16 %v299
        %v584 = vunpack.c.l.b16 %v300
        %v585 = vunpack.c.l.b16 %v301
        %v586 = vunpack.c.l.b16 %v302
        %v587 = vunpack.c.l.b16 %v303
        %v588 = vunpack.c.l.b16 %v304
        %v589 = vunpack.c.l.b16 %v305
        %v590 = vunpack.c.l.b16 %v306
        %v591 = vunpack.c.l.b16 %v307
        %v592 = vunpack.c.l.b16 %v308
        %v593 = vunpack.c.l.b16 %v309
        %v594 = vunpack.c.l.b16 %v310
        %v595 = vunpack.c.l.b16 %v311
        %v596 = vunpack.c.l.b16 %v312
        %v597 = vunpack.c.l.b16 %v313
        %v598 = vunpack.c.l.b16 %v314
        %v599 = vunpack.c.l.b16 %v315
        %v600 = vunpack.c.l.b16 %v316
        %v601 = vunpack.c.l.b16 %v317
        %v602 = vunpack.c.l.b16 %v318
        %v603 = vunpack.c.l.b16 %v319
        %v604 = vunpack.c.l.b16 %v320
        %v605 = vunpack.c.l.b16 %v321
        %v606 = vunpack.c.l.b16 %v322
        %v607 = vunpack.c.l.b16 %v323
        %v608 = vunpack.c.l.b16 %v324
        %v609 = vunpack.c.l.b16 %v325
        %v610 = vunpack.c.l.b16 %v326
        %v611 = vunpack.c.l.b16 %v327
        %v612 = vunpack.c.l.b16 %v328
        %v613 = vunpack.c.l.b16 %v329
        %v614 = vunpack.c.l.b16 %v330
        %v615 = vunpack.c.l.b16 %v331
        %v616 = vunpack.c.l.b16 %v332
        %v617 = vunpack.c.l.b16 %v333
        %v618 = vunpack.c.l.b16 %v334
        %v619 = vunpack.c.l.b16 %v335
        %v620 = vunpack.c.l.b16 %v336
        %v621 = vunpack.c.l.b16 %v337
        %v622 = vunpack.c.l.b16 %v338
        %v623 = vunpack.c.l.b16 %v339
        %v624 = vunpack.c.l.b16 %v340
        %v625 = vunpack.c.l.b16 %v341
        %v626 = vunpack.c.l.b16 %v342
        %v627 = vunpack.c.l.b16 %v343
        %v628 = vunpack.c.l.b16 %v344
        %v629 = vunpack.c.l.b16 %v345
        %v630 = vunpack.c.l.b16 %v346
        %v631 = vunpack.c.l.b16 %v347
        %v632 = vunpack.c.l.b16 %v348
        %v633 = vunpack.c.l.b16 %v349
        %v634 = vunpack.c.l.b16 %v350
        %v635 = vunpack.c.l.b16 %v351
        %v636 = vunpack.c.l.b16 %v352
        %v637 = vunpack.c.l.b16 %v353
        %v638 = vunpack.c.l.b16 %v354
        %v639 = vunpack.c.l.b16 %v355
        %v640 = vpack.c.b16 %v513, %v512
        %v641 = vpack.c.b16 %v515, %v514
        %v642 = vpack.c.b16 %v517, %v516
        %v643 = vpack.c.b16 %v519, %v518
        %v644 = vpack.c.b16 %v521, %v520
        %v645 = vpack.c.b16 %v523, %v522
        %v646 = vpack.c.b16 %v525, %v524
        %v647 = vpack.c.b16 %v527, %v526
        %v648 = vpack.c.b16 %v529, %v528
        %v649 = vpack.c.b16 %v531, %v530
        %v650 = vpack.c.b16 %v533, %v532
        %v651 = vpack.c.b16 %v535, %v534
        %v652 = vpack.c.b16 %v537, %v536
        %v653 = vpack.c.b16 %v539, %v538
        %v654 = vpack.c.b16 %v541, %v540
        %v655 = vpack.c.b16 %v543, %v542
        %v656 = vpack.c.b16 %v545, %v544
        %v657 = vpack.c.b16 %v547, %v546
        %v658 = vpack.c.b16 %v549, %v548
        %v659 = vpack.c.b16 %v551, %v550
        %v660 = vpack.c.b16 %v553, %v552
        %v661 = vpack.c.b16 %v555, %v554
        %v662 = vpack.c.b16 %v557, %v556
        %v663 = vpack.c.b16 %v559, %v558
        %v664 = vpack.c.b16 %v561, %v560
        %v665 = vpack.c.b16 %v563, %v562
        %v666 = vpack.c.b16 %v565, %v564
        %v667 = vpack.c.b16 %v567, %v566
        %v668 = vpack.c.b16 %v569, %v568
        %v669 = vpack.c.b16 %v571, %v570
        %v670 = vpack.c.b16 %v573, %v572
        %v671 = vpack.c.b16 %v575, %v574
        %v672 = vpack.c.b16 %v577, %v576
        %v673 = vpack.c.b16 %v579, %v578
        %v674 = vpack.c.b16 %v581, %v580
        %v675 = vpack.c.b16 %v583, %v582
        %v676 = vpack.c.b16 %v585, %v584
        %v677 = vpack.c.b16 %v587, %v586
        %v678 = vpack.c.b16 %v589, %v588
        %v679 = vpack.c.b16 %v591, %v590
        %v680 = vpack.c.b16 %v593, %v592
        %v681 = vpack.c.b16 %v595, %v594
        %v682 = vpack.c.b16 %v597, %v596
        %v683 = vpack.c.b16 %v599, %v598
        %v684 = vpack.c.b16 %v601, %v600
        %v685 = vpack.c.b16 %v603, %v602
        %v686 = vpack.c.b16 %v605, %v604
        %v687 = vpack.c.b16 %v607, %v606
        %v688 = vpack.c.b16 %v609, %v608
        %v689 = vpack.c.b16 %v611, %v610
        %v690 = vpack.c.b16 %v613, %v612
        %v691 = vpack.c.b16 %v615, %v614
        %v692 = vpack.c.b16 %v617, %v616
        %v693 = vpack.c.b16 %v619, %v618
        %v694 = vpack.c.b16 %v621, %v620
        %v695 = vpack.c.b16 %v623, %v622
        %v696 = vpack.c.b16 %v625, %v624
        %v697 = vpack.c.b16 %v627, %v626
        %v698 = vpack.c.b16 %v629, %v628
        %v699 = vpack.c.b16 %v631, %v630
        %v700 = vpack.c.b16 %v633, %v632
        %v701 = vpack.c.b16 %v635, %v634
        %v702 = vpack.c.b16 %v637, %v636
        %v703 = vpack.c.b16 %v639, %v638
        %768 = vmatprep.subr.bf16.mxu0 0
        %769 = vmatpush1.bf16.msra.mxu0 %v640
        %770 = vmatprep.subr.bf16.mxu0 0
        %771 = vmatpush1.bf16.msra.mxu0 %v641
        %772 = vmatprep.subr.bf16.mxu0 0
        %773 = vmatpush1.bf16.msra.mxu0 %v642
        %774 = vmatprep.subr.bf16.mxu0 0
        %775 = vmatpush1.bf16.msra.mxu0 %v643
        %776 = vmatprep.subr.bf16.mxu0 0
        %777 = vmatpush1.bf16.msra.mxu0 %v644
        %778 = vmatprep.subr.bf16.mxu0 0
        %779 = vmatpush1.bf16.msra.mxu0 %v645
        %780 = vmatprep.subr.bf16.mxu0 0
        %781 = vmatpush1.bf16.msra.mxu0 %v646
        %782 = vmatprep.subr.bf16.mxu0 0
        %783 = vmatpush1.bf16.msra.mxu0 %v647
        %784 = vmatprep.subr.bf16.mxu0 0
        %785 = vmatpush1.bf16.msra.mxu0 %v648
        %786 = vmatprep.subr.bf16.mxu0 0
        %787 = vmatpush1.bf16.msra.mxu0 %v649
        %788 = vmatprep.subr.bf16.mxu0 0
        %789 = vmatpush1.bf16.msra.mxu0 %v650
        %790 = vmatprep.subr.bf16.mxu0 0
        %791 = vmatpush1.bf16.msra.mxu0 %v651
        %792 = vmatprep.subr.bf16.mxu0 0
        %793 = vmatpush1.bf16.msra.mxu0 %v652
        %794 = vmatprep.subr.bf16.mxu0 0
        %795 = vmatpush1.bf16.msra.mxu0 %v653
        %796 = vmatprep.subr.bf16.mxu0 0
        %797 = vmatpush1.bf16.msra.mxu0 %v654
        %798 = vmatprep.subr.bf16.mxu0 0
        %799 = vmatpush1.bf16.msra.mxu0 %v655
        %800 = vmatprep.mubr.bf16.mxu0 %v369
        %801 = vmatmul.mubr.bf16.gmra.mrb[0].mxu0 %v368
        %v802 = vpop.f32.mrb[0].mxu0
        %v803 = vadd.f32 0.0, %v802
        %v804 = vpop.f32.mrb[0].mxu0
        %v805 = vpop.f32.mrb[0].mxu0
        %v806 = vpop.f32.mrb[0].mxu0
        %807 = vdwg.mxu0
        %808 = vmatprep.subr.bf16.mxu0 0
        %809 = vmatpush1.bf16.msra.mxu0 %v656
        %810 = vmatprep.subr.bf16.mxu0 0
        %811 = vmatpush1.bf16.msra.mxu0 %v657
        %812 = vmatprep.subr.bf16.mxu0 0
        %813 = vmatpush1.bf16.msra.mxu0 %v658
        %814 = vmatprep.subr.bf16.mxu0 0
        %815 = vmatpush1.bf16.msra.mxu0 %v659
        %816 = vmatprep.subr.bf16.mxu0 0
        %817 = vmatpush1.bf16.msra.mxu0 %v660
        %818 = vmatprep.subr.bf16.mxu0 0
        %819 = vmatpush1.bf16.msra.mxu0 %v661
        %820 = vmatprep.subr.bf16.mxu0 0
        %821 = vmatpush1.bf16.msra.mxu0 %v662
        %822 = vmatprep.subr.bf16.mxu0 0
        %823 = vmatpush1.bf16.msra.mxu0 %v663
        %824 = vmatprep.subr.bf16.mxu0 0
        %825 = vmatpush1.bf16.msra.mxu0 %v664
        %826 = vmatprep.subr.bf16.mxu0 0
        %827 = vmatpush1.bf16.msra.mxu0 %v665
        %828 = vmatprep.subr.bf16.mxu0 0
        %829 = vmatpush1.bf16.msra.mxu0 %v666
        %830 = vmatprep.subr.bf16.mxu0 0
        %831 = vmatpush1.bf16.msra.mxu0 %v667
        %832 = vmatprep.subr.bf16.mxu0 0
        %833 = vmatpush1.bf16.msra.mxu0 %v668
        %834 = vmatprep.subr.bf16.mxu0 0
        %835 = vmatpush1.bf16.msra.mxu0 %v669
        %836 = vmatprep.subr.bf16.mxu0 0
        %837 = vmatpush1.bf16.msra.mxu0 %v670
        %838 = vmatprep.subr.bf16.mxu0 0
        %839 = vmatpush1.bf16.msra.mxu0 %v671
        %840 = vmatprep.mubr.bf16.mxu0 %v371
        %841 = vmatmul.mubr.bf16.gmra.mrb[0].mxu0 %v370
        %v842 = vpop.f32.mrb[0].mxu0
        %v843 = vadd.f32 %v803, %v842
        %v844 = vpop.f32.mrb[0].mxu0
        %v845 = vpop.f32.mrb[0].mxu0
        %v846 = vpop.f32.mrb[0].mxu0
        %847 = vdwg.mxu0
        %848 = vmatprep.subr.bf16.mxu0 0
        %849 = vmatpush1.bf16.msra.mxu0 %v672
        %850 = vmatprep.subr.bf16.mxu0 0
        %851 = vmatpush1.bf16.msra.mxu0 %v673
        %852 = vmatprep.subr.bf16.mxu0 0
        %853 = vmatpush1.bf16.msra.mxu0 %v674
        %854 = vmatprep.subr.bf16.mxu0 0
        %855 = vmatpush1.bf16.msra.mxu0 %v675
        %856 = vmatprep.subr.bf16.mxu0 0
        %857 = vmatpush1.bf16.msra.mxu0 %v676
        %858 = vmatprep.subr.bf16.mxu0 0
        %859 = vmatpush1.bf16.msra.mxu0 %v677
        %860 = vmatprep.subr.bf16.mxu0 0
        %861 = vmatpush1.bf16.msra.mxu0 %v678
        %862 = vmatprep.subr.bf16.mxu0 0
        %863 = vmatpush1.bf16.msra.mxu0 %v679
        %864 = vmatprep.subr.bf16.mxu0 0
        %865 = vmatpush1.bf16.msra.mxu0 %v680
        %866 = vmatprep.subr.bf16.mxu0 0
        %867 = vmatpush1.bf16.msra.mxu0 %v681
        %868 = vmatprep.subr.bf16.mxu0 0
        %869 = vmatpush1.bf16.msra.mxu0 %v682
        %870 = vmatprep.subr.bf16.mxu0 0
        %871 = vmatpush1.bf16.msra.mxu0 %v683
        %872 = vmatprep.subr.bf16.mxu0 0
        %873 = vmatpush1.bf16.msra.mxu0 %v684
        %874 = vmatprep.subr.bf16.mxu0 0
        %875 = vmatpush1.bf16.msra.mxu0 %v685
        %876 = vmatprep.subr.bf16.mxu0 0
        %877 = vmatpush1.bf16.msra.mxu0 %v686
        %878 = vmatprep.subr.bf16.mxu0 0
        %879 = vmatpush1.bf16.msra.mxu0 %v687
        %880 = vmatprep.mubr.bf16.mxu0 %v373
        %881 = vmatmul.mubr.bf16.gmra.mrb[0].mxu0 %v372
        %v882 = vpop.f32.mrb[0].mxu0
        %v883 = vadd.f32 %v843, %v882
        %v884 = vpop.f32.mrb[0].mxu0
        %v885 = vpop.f32.mrb[0].mxu0
        %v886 = vpop.f32.mrb[0].mxu0
        %887 = vdwg.mxu0
        %888 = vmatprep.subr.bf16.mxu0 0
        %889 = vmatpush1.bf16.msra.mxu0 %v688
        %890 = vmatprep.subr.bf16.mxu0 0
        %891 = vmatpush1.bf16.msra.mxu0 %v689
        %892 = vmatprep.subr.bf16.mxu0 0
        %893 = vmatpush1.bf16.msra.mxu0 %v690
        %894 = vmatprep.subr.bf16.mxu0 0
        %895 = vmatpush1.bf16.msra.mxu0 %v691
        %896 = vmatprep.subr.bf16.mxu0 0
        %897 = vmatpush1.bf16.msra.mxu0 %v692
        %898 = vmatprep.subr.bf16.mxu0 0
        %899 = vmatpush1.bf16.msra.mxu0 %v693
        %900 = vmatprep.subr.bf16.mxu0 0
        %901 = vmatpush1.bf16.msra.mxu0 %v694
        %902 = vmatprep.subr.bf16.mxu0 0
        %903 = vmatpush1.bf16.msra.mxu0 %v695
        %904 = vmatprep.subr.bf16.mxu0 0
        %905 = vmatpush1.bf16.msra.mxu0 %v696
        %906 = vmatprep.subr.bf16.mxu0 0
        %907 = vmatpush1.bf16.msra.mxu0 %v697
        %908 = vmatprep.subr.bf16.mxu0 0
        %909 = vmatpush1.bf16.msra.mxu0 %v698
        %910 = vmatprep.subr.bf16.mxu0 0
        %911 = vmatpush1.bf16.msra.mxu0 %v699
        %912 = vmatprep.subr.bf16.mxu0 0
        %913 = vmatpush1.bf16.msra.mxu0 %v700
        %914 = vmatprep.subr.bf16.mxu0 0
        %915 = vmatpush1.bf16.msra.mxu0 %v701
        %916 = vmatprep.subr.bf16.mxu0 0
        %917 = vmatpush1.bf16.msra.mxu0 %v702
        %918 = vmatprep.subr.bf16.mxu0 0
        %919 = vmatpush1.bf16.msra.mxu0 %v703
        %920 = vmatprep.mubr.bf16.mxu0 %v375
        %921 = vmatmul.mubr.bf16.gmra.mrb[0].mxu0 %v374
        %v922 = vpop.f32.mrb[0].mxu0
        %v923 = vadd.f32 %v883, %v922
        %v924 = vpop.f32.mrb[0].mxu0
        %v925 = vpop.f32.mrb[0].mxu0
        %v926 = vpop.f32.mrb[0].mxu0
        %927 = vdwg.mxu0
        %v928 = vadd.f32 %v223, %v923
        %929 = vst [vmem:[#allocation2] sm:$0xff] %v928
        %p930 = scmp.eq.s32.totalorder %s21, 2
        // Predicated region
        $region45: #{tpu_custom_call.1} parent=31 // pred_check
          %p931 = pneg %p930
        $region46: #{tpu_custom_call.1} parent=31 // pred_check_branch
          %933 = sbr.rel (%p931) target = $region48
        $region47: #{tpu_custom_call.1} parent=31 // pred_region
          %v934 = vld [vmem:[#allocation2] sm:$0xff]
          %v935 = vld [vmem:[%s2] sm:$0x1]
          %v937 = vlaneseq
          %v938 = vshrl.u32 %v937, 7
          %v939 = vsub.s32 0, %v938
          %v940 = vrot.slane %v935, %v939
          %v942 = vadd.f32 %v934, %v940
          %v943 = vlaneseq
          %v944 = vand.u32 %v943, 127
          %vm945 = vcmp.lt.s32.totalorder %v944, 10
          %v946 = vsel %vm945, %v942, -1e+30
          %947 = vmax.xlane.f32.xlu0 %v946
          %v948 = vpop.xlane.xlu0 %947
          %v949 = vsub.f32 %v946, %v948
          %v950 = vmul.f32 %v949, 1.442695
          %v951 = vpow.pop %v950
          %952 = vadd.xlane.f32.xlu0 %v951
          %v953 = vpop.xlane.xlu0 %952
          %v954 = vlog2.pop %v953
          %v955 = vmul.f32 %v954, 0.6931472
          %v956 = vsub.f32 %v949, %v955
          %957 = vst [vmem:[#allocation8] sm:$0xff] %v956
        $region48: #{tpu_custom_call.1} parent=31 // pred_fallthru
          _
        // Predicated region
        $region49: #{tpu_custom_call.1} parent=31 // pred_check
          %p958 = pneg %p107
        $region50: #{tpu_custom_call.1} parent=31 // pred_check_branch
          %960 = sbr.rel (%p958) target = $region52
        $region51: #{tpu_custom_call.1} parent=31 // pred_region
          %s962 = ssub.s32 128, 128
          %963 = vsyncadd [#allocation5], %s962
          %s965 = sshll.u32 [#allocation8], 4
          %s966 = int_to_ptr.vmem [resolvable:$true] %s965
          %968 = dma.vmem_to_hbm [thread:$0]  %s966, 128, %s3, [#allocation5]
        $region52: #{tpu_custom_call.1} parent=31 // pred_fallthru
          _
        // Predicated region
        $region53: #{tpu_custom_call.1} parent=31 // pred_check
          %p969 = pneg %p107
        $region54: #{tpu_custom_call.1} parent=31 // pred_check_branch
          %971 = sbr.rel (%p969) target = $region56
        $region55: #{tpu_custom_call.1} parent=31 // pred_region
          %972 = dma.done [#allocation5], 128
        $region56: #{tpu_custom_call.1} parent=31 // pred_fallthru
          _
      $region32: #{tpu_custom_call.1} parent=5 // pred_fallthru
        _
      %p973 = scmp.le.s32.totalorder 2, %s16
      // Predicated region
      $region57: #{tpu_custom_call.1} parent=5 // pred_check
        %p974 = pneg %p973
      $region58: #{tpu_custom_call.1} parent=5 // pred_check_branch
        %976 = sbr.rel (%p974) target = $region60
      $region59: #{tpu_custom_call.1} parent=5 // pred_region
        %s977 = ssub.s32 %s16, 2
      $region60: #{tpu_custom_call.1} parent=5 // pred_fallthru
        _
    $region6: #{tpu_custom_call.1} parent=1 // loop_footer
      %s20 = sadd.s32 1, %s16
    $region7: #{tpu_custom_call.1} parent=1 // loop_footer_branch
      %15 = sbr.rel target = $region3
    $region8: #{tpu_custom_call.1} parent=1 // loop_exit
      _
    %978 = vsyncpa [#allocation4], 1
    %s979 = scalar_lea.sflag [#allocation4], 1
    %980 = vsyncpa %s979, 1
    %981 = vsyncpa [#allocation7], 1
    %s982 = scalar_lea.sflag [#allocation7], 1
    %983 = vsyncpa %s982, 1
    %984 = vsyncpa [#allocation5], 1
    %s985 = scalar_lea.sflag [#allocation5], 1
    %986 = vsyncpa %s985, 1

</llo_original>
